<compile_context>
chip_gen: v6e
topology: v6e:2x2x1
jax: 0.10.0
libtpu: 0.0.40
codegen_flags: <defaults>
</compile_context>

<pallas_src>
import jax
import jax.numpy as jnp
from jax.experimental import pallas as pl
from jax.experimental.pallas import tpu as pltpu

KSIZE = 5
PAD = KSIZE // 2


def _stego_kernel(w_ref, x_ref, o_ref):
    """One grid step = one channel, all batches.

    w_ref : (C*25,)   SMEM  flattened per-channel 5x5 filters (scalar prefetch)
    x_ref : (B, H, W) VMEM  input planes for this channel (C dim squeezed)
    o_ref : (B, H, W) VMEM  output score planes
    """
    c = pl.program_id(0)
    x = x_ref[...].astype(jnp.float32)            # (B, H, W)
    B, H, W = x.shape

    # index grids for the zero-padding masks (built once per channel)
    ri = jax.lax.broadcasted_iota(jnp.int32, (B, H, W), 1)   # row index
    ci = jax.lax.broadcasted_iota(jnp.int32, (B, H, W), 2)   # col index

    # ---- 5 row-shifted, zero-filled copies: rows[di][b,i,:] = x[b, i+di-2, :]
    #      (sublane roll on the XLU + one select; no scratch stores) ----
    rows = []
    for di in range(KSIZE):
        d = di - PAD
        if d == 0:
            rows.append(x)
        else:
            shifted = pltpu.roll(x, shift=(-d) % H, axis=1)
            valid = (ri + d >= 0) & (ri + d < H)
            rows.append(jnp.where(valid, shifted, 0.0))

    # ---- 25-tap 'same' conv, factored per output-column offset dj ----
    base = c * (KSIZE * KSIZE)
    acc = jnp.zeros((B, H, W), jnp.float32)
    for dj in range(KSIZE):
        # row-tap partial sum: 5 scalar*vector FMAs, weights read from SMEM
        rsum = w_ref[base + dj] * rows[0]
        for di in range(1, KSIZE):
            rsum = rsum + w_ref[base + di * KSIZE + dj] * rows[di]
        # column shift with zero fill: acc[...,j] += rsum[..., j+dj-2]
        d = dj - PAD
        if d == 0:
            acc = acc + rsum
        else:
            shifted = pltpu.roll(rsum, shift=(-d) % W, axis=2)
            valid = (ci + d >= 0) & (ci + d < W)
            acc = acc + jnp.where(valid, shifted, 0.0)

    # ---- StegoScore epilogue: sigmoid(|residual|) via EUP exp + recip ----
    score = pl.reciprocal(1.0 + jnp.exp(-jnp.abs(acc)), approx=True)
    o_ref[...] = score.astype(o_ref.dtype)


def channelwise_stego_score(x, weights):
    """x: (B, C, H, W) float32; weights: (C, 5, 5) float32 (one filter / channel)."""
    B, C, H, W = x.shape
    assert weights.shape == (C, KSIZE, KSIZE)

    # Per-step VMEM budget (one channel, all batches):
    #   in/out blocks double-buffered (2 arrays x 2 buffers)
    #   + live values: x, 5 shifted row copies, acc, rsum, ~2 transients/masks
    plane = B * H * W * 4
    footprint = (2 * 2 + 10) * plane
    vmem_limit = 32 * 1024 * 1024
    # TODO(synk): when this trips, tile H with overlapping (TH + 2*PAD) blocks.
    assert footprint < vmem_limit // 2, "plane too large for whole-plane blocks"

    w_flat = weights.reshape(C * KSIZE * KSIZE).astype(jnp.float32)

    return pl.pallas_call(
        _stego_kernel,
        out_shape=jax.ShapeDtypeStruct((B, C, H, W), x.dtype),
        grid_spec=pltpu.PrefetchScalarGridSpec(
            num_scalar_prefetch=1,            # weights -> SMEM, scalar reads
            grid=(C,),
            in_specs=[
                # channel dim squeezed (None); last two block dims = full dims
                pl.BlockSpec((B, None, H, W), lambda c, w: (0, c, 0, 0)),
            ],
            out_specs=pl.BlockSpec((B, None, H, W), lambda c, w: (0, c, 0, 0)),
        ),
        compiler_params=pltpu.CompilerParams(
            dimension_semantics=("parallel",),
            vmem_limit_bytes=vmem_limit,
        ),
    )(w_flat, x)


def make_weights(num_channels, key):
    """Deterministic init: the standard KV 5x5 high-pass filter per channel
    (what a fresh trainable StegoScore would start from), plus a tiny
    per-channel perturbation so the 3 independent instances differ."""
    kv = (1.0 / 12.0) * jnp.array(
        [[-1.,  2., -2.,  2., -1.],
         [ 2., -6.,  8., -6.,  2.],
         [-2.,  8., -12., 8., -2.],
         [ 2., -6.,  8., -6.,  2.],
         [-1.,  2., -2.,  2., -1.]],
        dtype=jnp.float32,
    )
    base = jnp.broadcast_to(kv, (num_channels, KSIZE, KSIZE))
    pert = 1e-3 * jax.random.normal(
        key, (num_channels, KSIZE, KSIZE), dtype=jnp.float32)
    return base + pert


if __name__ == "__main__":
    # C must be 3: the PyTorch module builds 3 trainable StegoScore instances.
    B, C, H, W = 2, 3, 16, 16
    key = jax.random.PRNGKey(0)
    kx, kw = jax.random.split(key)
    x = jax.random.normal(kx, (B, C, H, W), dtype=jnp.float32)
    weights = make_weights(C, kw)

    out = jax.block_until_ready(channelwise_stego_score(x, weights))
    assert out.shape == (B, C, H, W)
    assert out.dtype == x.dtype

    # sanity check against a plain-JAX reference of the same semantics
    def ref(x, w):
        xp = jnp.pad(x, ((0, 0), (0, 0), (PAD, PAD), (PAD, PAD)))
        outs = []
        for c in range(x.shape[1]):
            res = jax.lax.conv_general_dilated(
                xp[:, c:c + 1], w[c][None, None], (1, 1), "VALID",
                dimension_numbers=("NCHW", "OIHW", "NCHW"))
            outs.append(jax.nn.sigmoid(jnp.abs(res)))
        return jnp.concatenate(outs, axis=1)

    import numpy as np
    # tolerance covers the approximate (EUP) reciprocal in the sigmoid
    np.testing.assert_allclose(np.asarray(out), np.asarray(ref(x, weights)),
                               rtol=5e-3, atol=5e-3)

    print("KERNEL_OK")
</pallas_src>

<mosaic_0001>
module attributes {stable_mosaic.version = 11 : i64} {
  func.func @_stego_kernel(%arg0: i32, %arg1: memref<75xf32, #tpu.memory_space<smem>>, %arg2: memref<2x1x16x16xf32, #tpu.memory_space<vmem>>, %arg3: memref<2x1x16x16xf32, #tpu.memory_space<vmem>>) attributes {dimension_semantics = [#tpu.dimension_semantics<parallel>], iteration_bounds = array<i64: 3>, scalar_prefetch = 1 : i64, scratch_operands = 0 : i64, tpu.core_type = #tpu.core_type<tc>, window_params = [{transform_indices = @transform_0, window_bounds = array<i64: 2, 1, 16, 16>}, {transform_indices = @transform_1, window_bounds = array<i64: 2, 1, 16, 16>}]} {
    %c0 = arith.constant 0 : index
    %c0_0 = arith.constant 0 : index
    %c0_1 = arith.constant 0 : index
    %c0_2 = arith.constant 0 : index
    %0 = vector.load %arg2[%c0, %c0_0, %c0_1, %c0_2] : memref<2x1x16x16xf32, #tpu.memory_space<vmem>>, vector<2x1x16x16xf32>
    %1 = vector.shape_cast %0 : vector<2x1x16x16xf32> to vector<2x16x16xf32>
    %2 = tpu.iota {dimensions = array<i32: 1>} : vector<2x16x16xi32>
    %3 = tpu.iota {dimensions = array<i32: 2>} : vector<2x16x16xi32>
    %c2_i32 = arith.constant 2 : i32
    %4 = tpu.dynamic_rotate %1 by %c2_i32 dim 1 : vector<2x16x16xf32>, i32 -> vector<2x16x16xf32>
    %c-2_i32 = arith.constant -2 : i32
    %5 = vector.broadcast %c-2_i32 : i32 to vector<2x16x16xi32>
    %6 = arith.addi %2, %5 : vector<2x16x16xi32>
    %c0_i32 = arith.constant 0 : i32
    %7 = vector.broadcast %c0_i32 : i32 to vector<2x16x16xi32>
    %8 = arith.cmpi sge, %6, %7 : vector<2x16x16xi32>
    %c-2_i32_3 = arith.constant -2 : i32
    %9 = vector.broadcast %c-2_i32_3 : i32 to vector<2x16x16xi32>
    %10 = arith.addi %2, %9 : vector<2x16x16xi32>
    %c16_i32 = arith.constant 16 : i32
    %11 = vector.broadcast %c16_i32 : i32 to vector<2x16x16xi32>
    %12 = arith.cmpi slt, %10, %11 : vector<2x16x16xi32>
    %13 = arith.andi %8, %12 : vector<2x16x16xi1>
    %cst = arith.constant 0.000000e+00 : f32
    %14 = vector.broadcast %cst : f32 to vector<2x16x16xf32>
    %15 = arith.select %13, %4, %14 : vector<2x16x16xi1>, vector<2x16x16xf32>
    %c1_i32 = arith.constant 1 : i32
    %16 = tpu.dynamic_rotate %1 by %c1_i32 dim 1 : vector<2x16x16xf32>, i32 -> vector<2x16x16xf32>
    %c-1_i32 = arith.constant -1 : i32
    %17 = vector.broadcast %c-1_i32 : i32 to vector<2x16x16xi32>
    %18 = arith.addi %2, %17 : vector<2x16x16xi32>
    %c0_i32_4 = arith.constant 0 : i32
    %19 = vector.broadcast %c0_i32_4 : i32 to vector<2x16x16xi32>
    %20 = arith.cmpi sge, %18, %19 : vector<2x16x16xi32>
    %c-1_i32_5 = arith.constant -1 : i32
    %21 = vector.broadcast %c-1_i32_5 : i32 to vector<2x16x16xi32>
    %22 = arith.addi %2, %21 : vector<2x16x16xi32>
    %c16_i32_6 = arith.constant 16 : i32
    %23 = vector.broadcast %c16_i32_6 : i32 to vector<2x16x16xi32>
    %24 = arith.cmpi slt, %22, %23 : vector<2x16x16xi32>
    %25 = arith.andi %20, %24 : vector<2x16x16xi1>
    %cst_7 = arith.constant 0.000000e+00 : f32
    %26 = vector.broadcast %cst_7 : f32 to vector<2x16x16xf32>
    %27 = arith.select %25, %16, %26 : vector<2x16x16xi1>, vector<2x16x16xf32>
    %c15_i32 = arith.constant 15 : i32
    %28 = tpu.dynamic_rotate %1 by %c15_i32 dim 1 : vector<2x16x16xf32>, i32 -> vector<2x16x16xf32>
    %c1_i32_8 = arith.constant 1 : i32
    %29 = vector.broadcast %c1_i32_8 : i32 to vector<2x16x16xi32>
    %30 = arith.addi %2, %29 : vector<2x16x16xi32>
    %c0_i32_9 = arith.constant 0 : i32
    %31 = vector.broadcast %c0_i32_9 : i32 to vector<2x16x16xi32>
    %32 = arith.cmpi sge, %30, %31 : vector<2x16x16xi32>
    %c1_i32_10 = arith.constant 1 : i32
    %33 = vector.broadcast %c1_i32_10 : i32 to vector<2x16x16xi32>
    %34 = arith.addi %2, %33 : vector<2x16x16xi32>
    %c16_i32_11 = arith.constant 16 : i32
    %35 = vector.broadcast %c16_i32_11 : i32 to vector<2x16x16xi32>
    %36 = arith.cmpi slt, %34, %35 : vector<2x16x16xi32>
    %37 = arith.andi %32, %36 : vector<2x16x16xi1>
    %cst_12 = arith.constant 0.000000e+00 : f32
    %38 = vector.broadcast %cst_12 : f32 to vector<2x16x16xf32>
    %39 = arith.select %37, %28, %38 : vector<2x16x16xi1>, vector<2x16x16xf32>
    %c14_i32 = arith.constant 14 : i32
    %40 = tpu.dynamic_rotate %1 by %c14_i32 dim 1 : vector<2x16x16xf32>, i32 -> vector<2x16x16xf32>
    %c2_i32_13 = arith.constant 2 : i32
    %41 = vector.broadcast %c2_i32_13 : i32 to vector<2x16x16xi32>
    %42 = arith.addi %2, %41 : vector<2x16x16xi32>
    %c0_i32_14 = arith.constant 0 : i32
    %43 = vector.broadcast %c0_i32_14 : i32 to vector<2x16x16xi32>
    %44 = arith.cmpi sge, %42, %43 : vector<2x16x16xi32>
    %c2_i32_15 = arith.constant 2 : i32
    %45 = vector.broadcast %c2_i32_15 : i32 to vector<2x16x16xi32>
    %46 = arith.addi %2, %45 : vector<2x16x16xi32>
    %c16_i32_16 = arith.constant 16 : i32
    %47 = vector.broadcast %c16_i32_16 : i32 to vector<2x16x16xi32>
    %48 = arith.cmpi slt, %46, %47 : vector<2x16x16xi32>
    %49 = arith.andi %44, %48 : vector<2x16x16xi1>
    %cst_17 = arith.constant 0.000000e+00 : f32
    %50 = vector.broadcast %cst_17 : f32 to vector<2x16x16xf32>
    %51 = arith.select %49, %40, %50 : vector<2x16x16xi1>, vector<2x16x16xf32>
    %c25_i32 = arith.constant 25 : i32
    %52 = arith.muli %arg0, %c25_i32 : i32
    %cst_18 = arith.constant 0.000000e+00 : f32
    %53 = vector.broadcast %cst_18 : f32 to vector<2x16x16xf32>
    %c0_i32_19 = arith.constant 0 : i32
    %54 = arith.addi %52, %c0_i32_19 : i32
    %55 = arith.index_cast %54 : i32 to index
    %56 = memref.load %arg1[%55] : memref<75xf32, #tpu.memory_space<smem>>
    %57 = vector.broadcast %56 : f32 to vector<2x16x16xf32>
    %58 = arith.mulf %57, %15 : vector<2x16x16xf32>
    %c5_i32 = arith.constant 5 : i32
    %59 = arith.addi %52, %c5_i32 : i32
    %c0_i32_20 = arith.constant 0 : i32
    %60 = arith.addi %59, %c0_i32_20 : i32
    %61 = arith.index_cast %60 : i32 to index
    %62 = memref.load %arg1[%61] : memref<75xf32, #tpu.memory_space<smem>>
    %63 = vector.broadcast %62 : f32 to vector<2x16x16xf32>
    %64 = arith.mulf %63, %27 : vector<2x16x16xf32>
    %65 = arith.addf %58, %64 : vector<2x16x16xf32>
    %c10_i32 = arith.constant 10 : i32
    %66 = arith.addi %52, %c10_i32 : i32
    %c0_i32_21 = arith.constant 0 : i32
    %67 = arith.addi %66, %c0_i32_21 : i32
    %68 = arith.index_cast %67 : i32 to index
    %69 = memref.load %arg1[%68] : memref<75xf32, #tpu.memory_space<smem>>
    %70 = vector.broadcast %69 : f32 to vector<2x16x16xf32>
    %71 = arith.mulf %70, %1 : vector<2x16x16xf32>
    %72 = arith.addf %65, %71 : vector<2x16x16xf32>
    %c15_i32_22 = arith.constant 15 : i32
    %73 = arith.addi %52, %c15_i32_22 : i32
    %c0_i32_23 = arith.constant 0 : i32
    %74 = arith.addi %73, %c0_i32_23 : i32
    %75 = arith.index_cast %74 : i32 to index
    %76 = memref.load %arg1[%75] : memref<75xf32, #tpu.memory_space<smem>>
    %77 = vector.broadcast %76 : f32 to vector<2x16x16xf32>
    %78 = arith.mulf %77, %39 : vector<2x16x16xf32>
    %79 = arith.addf %72, %78 : vector<2x16x16xf32>
    %c20_i32 = arith.constant 20 : i32
    %80 = arith.addi %52, %c20_i32 : i32
    %c0_i32_24 = arith.constant 0 : i32
    %81 = arith.addi %80, %c0_i32_24 : i32
    %82 = arith.index_cast %81 : i32 to index
    %83 = memref.load %arg1[%82] : memref<75xf32, #tpu.memory_space<smem>>
    %84 = vector.broadcast %83 : f32 to vector<2x16x16xf32>
    %85 = arith.mulf %84, %51 : vector<2x16x16xf32>
    %86 = arith.addf %79, %85 : vector<2x16x16xf32>
    %c2_i32_25 = arith.constant 2 : i32
    %87 = tpu.dynamic_rotate %86 by %c2_i32_25 dim 2 : vector<2x16x16xf32>, i32 -> vector<2x16x16xf32>
    %c-2_i32_26 = arith.constant -2 : i32
    %88 = vector.broadcast %c-2_i32_26 : i32 to vector<2x16x16xi32>
    %89 = arith.addi %3, %88 : vector<2x16x16xi32>
    %c0_i32_27 = arith.constant 0 : i32
    %90 = vector.broadcast %c0_i32_27 : i32 to vector<2x16x16xi32>
    %91 = arith.cmpi sge, %89, %90 : vector<2x16x16xi32>
    %c-2_i32_28 = arith.constant -2 : i32
    %92 = vector.broadcast %c-2_i32_28 : i32 to vector<2x16x16xi32>
    %93 = arith.addi %3, %92 : vector<2x16x16xi32>
    %c16_i32_29 = arith.constant 16 : i32
    %94 = vector.broadcast %c16_i32_29 : i32 to vector<2x16x16xi32>
    %95 = arith.cmpi slt, %93, %94 : vector<2x16x16xi32>
    %96 = arith.andi %91, %95 : vector<2x16x16xi1>
    %cst_30 = arith.constant 0.000000e+00 : f32
    %97 = vector.broadcast %cst_30 : f32 to vector<2x16x16xf32>
    %98 = arith.select %96, %87, %97 : vector<2x16x16xi1>, vector<2x16x16xf32>
    %99 = arith.addf %53, %98 : vector<2x16x16xf32>
    %c1_i32_31 = arith.constant 1 : i32
    %100 = arith.addi %52, %c1_i32_31 : i32
    %101 = arith.index_cast %100 : i32 to index
    %102 = memref.load %arg1[%101] : memref<75xf32, #tpu.memory_space<smem>>
    %103 = vector.broadcast %102 : f32 to vector<2x16x16xf32>
    %104 = arith.mulf %103, %15 : vector<2x16x16xf32>
    %c5_i32_32 = arith.constant 5 : i32
    %105 = arith.addi %52, %c5_i32_32 : i32
    %c1_i32_33 = arith.constant 1 : i32
    %106 = arith.addi %105, %c1_i32_33 : i32
    %107 = arith.index_cast %106 : i32 to index
    %108 = memref.load %arg1[%107] : memref<75xf32, #tpu.memory_space<smem>>
    %109 = vector.broadcast %108 : f32 to vector<2x16x16xf32>
    %110 = arith.mulf %109, %27 : vector<2x16x16xf32>
    %111 = arith.addf %104, %110 : vector<2x16x16xf32>
    %c10_i32_34 = arith.constant 10 : i32
    %112 = arith.addi %52, %c10_i32_34 : i32
    %c1_i32_35 = arith.constant 1 : i32
    %113 = arith.addi %112, %c1_i32_35 : i32
    %114 = arith.index_cast %113 : i32 to index
    %115 = memref.load %arg1[%114] : memref<75xf32, #tpu.memory_space<smem>>
    %116 = vector.broadcast %115 : f32 to vector<2x16x16xf32>
    %117 = arith.mulf %116, %1 : vector<2x16x16xf32>
    %118 = arith.addf %111, %117 : vector<2x16x16xf32>
    %c15_i32_36 = arith.constant 15 : i32
    %119 = arith.addi %52, %c15_i32_36 : i32
    %c1_i32_37 = arith.constant 1 : i32
    %120 = arith.addi %119, %c1_i32_37 : i32
    %121 = arith.index_cast %120 : i32 to index
    %122 = memref.load %arg1[%121] : memref<75xf32, #tpu.memory_space<smem>>
    %123 = vector.broadcast %122 : f32 to vector<2x16x16xf32>
    %124 = arith.mulf %123, %39 : vector<2x16x16xf32>
    %125 = arith.addf %118, %124 : vector<2x16x16xf32>
    %c20_i32_38 = arith.constant 20 : i32
    %126 = arith.addi %52, %c20_i32_38 : i32
    %c1_i32_39 = arith.constant 1 : i32
    %127 = arith.addi %126, %c1_i32_39 : i32
    %128 = arith.index_cast %127 : i32 to index
    %129 = memref.load %arg1[%128] : memref<75xf32, #tpu.memory_space<smem>>
    %130 = vector.broadcast %129 : f32 to vector<2x16x16xf32>
    %131 = arith.mulf %130, %51 : vector<2x16x16xf32>
    %132 = arith.addf %125, %131 : vector<2x16x16xf32>
    %c1_i32_40 = arith.constant 1 : i32
    %133 = tpu.dynamic_rotate %132 by %c1_i32_40 dim 2 : vector<2x16x16xf32>, i32 -> vector<2x16x16xf32>
    %c-1_i32_41 = arith.constant -1 : i32
    %134 = vector.broadcast %c-1_i32_41 : i32 to vector<2x16x16xi32>
    %135 = arith.addi %3, %134 : vector<2x16x16xi32>
    %c0_i32_42 = arith.constant 0 : i32
    %136 = vector.broadcast %c0_i32_42 : i32 to vector<2x16x16xi32>
    %137 = arith.cmpi sge, %135, %136 : vector<2x16x16xi32>
    %c-1_i32_43 = arith.constant -1 : i32
    %138 = vector.broadcast %c-1_i32_43 : i32 to vector<2x16x16xi32>
    %139 = arith.addi %3, %138 : vector<2x16x16xi32>
    %c16_i32_44 = arith.constant 16 : i32
    %140 = vector.broadcast %c16_i32_44 : i32 to vector<2x16x16xi32>
    %141 = arith.cmpi slt, %139, %140 : vector<2x16x16xi32>
    %142 = arith.andi %137, %141 : vector<2x16x16xi1>
    %cst_45 = arith.constant 0.000000e+00 : f32
    %143 = vector.broadcast %cst_45 : f32 to vector<2x16x16xf32>
    %144 = arith.select %142, %133, %143 : vector<2x16x16xi1>, vector<2x16x16xf32>
    %145 = arith.addf %99, %144 : vector<2x16x16xf32>
    %c2_i32_46 = arith.constant 2 : i32
    %146 = arith.addi %52, %c2_i32_46 : i32
    %147 = arith.index_cast %146 : i32 to index
    %148 = memref.load %arg1[%147] : memref<75xf32, #tpu.memory_space<smem>>
    %149 = vector.broadcast %148 : f32 to vector<2x16x16xf32>
    %150 = arith.mulf %149, %15 : vector<2x16x16xf32>
    %c5_i32_47 = arith.constant 5 : i32
    %151 = arith.addi %52, %c5_i32_47 : i32
    %c2_i32_48 = arith.constant 2 : i32
    %152 = arith.addi %151, %c2_i32_48 : i32
    %153 = arith.index_cast %152 : i32 to index
    %154 = memref.load %arg1[%153] : memref<75xf32, #tpu.memory_space<smem>>
    %155 = vector.broadcast %154 : f32 to vector<2x16x16xf32>
    %156 = arith.mulf %155, %27 : vector<2x16x16xf32>
    %157 = arith.addf %150, %156 : vector<2x16x16xf32>
    %c10_i32_49 = arith.constant 10 : i32
    %158 = arith.addi %52, %c10_i32_49 : i32
    %c2_i32_50 = arith.constant 2 : i32
    %159 = arith.addi %158, %c2_i32_50 : i32
    %160 = arith.index_cast %159 : i32 to index
    %161 = memref.load %arg1[%160] : memref<75xf32, #tpu.memory_space<smem>>
    %162 = vector.broadcast %161 : f32 to vector<2x16x16xf32>
    %163 = arith.mulf %162, %1 : vector<2x16x16xf32>
    %164 = arith.addf %157, %163 : vector<2x16x16xf32>
    %c15_i32_51 = arith.constant 15 : i32
    %165 = arith.addi %52, %c15_i32_51 : i32
    %c2_i32_52 = arith.constant 2 : i32
    %166 = arith.addi %165, %c2_i32_52 : i32
    %167 = arith.index_cast %166 : i32 to index
    %168 = memref.load %arg1[%167] : memref<75xf32, #tpu.memory_space<smem>>
    %169 = vector.broadcast %168 : f32 to vector<2x16x16xf32>
    %170 = arith.mulf %169, %39 : vector<2x16x16xf32>
    %171 = arith.addf %164, %170 : vector<2x16x16xf32>
    %c20_i32_53 = arith.constant 20 : i32
    %172 = arith.addi %52, %c20_i32_53 : i32
    %c2_i32_54 = arith.constant 2 : i32
    %173 = arith.addi %172, %c2_i32_54 : i32
    %174 = arith.index_cast %173 : i32 to index
    %175 = memref.load %arg1[%174] : memref<75xf32, #tpu.memory_space<smem>>
    %176 = vector.broadcast %175 : f32 to vector<2x16x16xf32>
    %177 = arith.mulf %176, %51 : vector<2x16x16xf32>
    %178 = arith.addf %171, %177 : vector<2x16x16xf32>
    %179 = arith.addf %145, %178 : vector<2x16x16xf32>
    %c3_i32 = arith.constant 3 : i32
    %180 = arith.addi %52, %c3_i32 : i32
    %181 = arith.index_cast %180 : i32 to index
    %182 = memref.load %arg1[%181] : memref<75xf32, #tpu.memory_space<smem>>
    %183 = vector.broadcast %182 : f32 to vector<2x16x16xf32>
    %184 = arith.mulf %183, %15 : vector<2x16x16xf32>
    %c5_i32_55 = arith.constant 5 : i32
    %185 = arith.addi %52, %c5_i32_55 : i32
    %c3_i32_56 = arith.constant 3 : i32
    %186 = arith.addi %185, %c3_i32_56 : i32
    %187 = arith.index_cast %186 : i32 to index
    %188 = memref.load %arg1[%187] : memref<75xf32, #tpu.memory_space<smem>>
    %189 = vector.broadcast %188 : f32 to vector<2x16x16xf32>
    %190 = arith.mulf %189, %27 : vector<2x16x16xf32>
    %191 = arith.addf %184, %190 : vector<2x16x16xf32>
    %c10_i32_57 = arith.constant 10 : i32
    %192 = arith.addi %52, %c10_i32_57 : i32
    %c3_i32_58 = arith.constant 3 : i32
    %193 = arith.addi %192, %c3_i32_58 : i32
    %194 = arith.index_cast %193 : i32 to index
    %195 = memref.load %arg1[%194] : memref<75xf32, #tpu.memory_space<smem>>
    %196 = vector.broadcast %195 : f32 to vector<2x16x16xf32>
    %197 = arith.mulf %196, %1 : vector<2x16x16xf32>
    %198 = arith.addf %191, %197 : vector<2x16x16xf32>
    %c15_i32_59 = arith.constant 15 : i32
    %199 = arith.addi %52, %c15_i32_59 : i32
    %c3_i32_60 = arith.constant 3 : i32
    %200 = arith.addi %199, %c3_i32_60 : i32
    %201 = arith.index_cast %200 : i32 to index
    %202 = memref.load %arg1[%201] : memref<75xf32, #tpu.memory_space<smem>>
    %203 = vector.broadcast %202 : f32 to vector<2x16x16xf32>
    %204 = arith.mulf %203, %39 : vector<2x16x16xf32>
    %205 = arith.addf %198, %204 : vector<2x16x16xf32>
    %c20_i32_61 = arith.constant 20 : i32
    %206 = arith.addi %52, %c20_i32_61 : i32
    %c3_i32_62 = arith.constant 3 : i32
    %207 = arith.addi %206, %c3_i32_62 : i32
    %208 = arith.index_cast %207 : i32 to index
    %209 = memref.load %arg1[%208] : memref<75xf32, #tpu.memory_space<smem>>
    %210 = vector.broadcast %209 : f32 to vector<2x16x16xf32>
    %211 = arith.mulf %210, %51 : vector<2x16x16xf32>
    %212 = arith.addf %205, %211 : vector<2x16x16xf32>
    %c15_i32_63 = arith.constant 15 : i32
    %213 = tpu.dynamic_rotate %212 by %c15_i32_63 dim 2 : vector<2x16x16xf32>, i32 -> vector<2x16x16xf32>
    %c1_i32_64 = arith.constant 1 : i32
    %214 = vector.broadcast %c1_i32_64 : i32 to vector<2x16x16xi32>
    %215 = arith.addi %3, %214 : vector<2x16x16xi32>
    %c0_i32_65 = arith.constant 0 : i32
    %216 = vector.broadcast %c0_i32_65 : i32 to vector<2x16x16xi32>
    %217 = arith.cmpi sge, %215, %216 : vector<2x16x16xi32>
    %c1_i32_66 = arith.constant 1 : i32
    %218 = vector.broadcast %c1_i32_66 : i32 to vector<2x16x16xi32>
    %219 = arith.addi %3, %218 : vector<2x16x16xi32>
    %c16_i32_67 = arith.constant 16 : i32
    %220 = vector.broadcast %c16_i32_67 : i32 to vector<2x16x16xi32>
    %221 = arith.cmpi slt, %219, %220 : vector<2x16x16xi32>
    %222 = arith.andi %217, %221 : vector<2x16x16xi1>
    %cst_68 = arith.constant 0.000000e+00 : f32
    %223 = vector.broadcast %cst_68 : f32 to vector<2x16x16xf32>
    %224 = arith.select %222, %213, %223 : vector<2x16x16xi1>, vector<2x16x16xf32>
    %225 = arith.addf %179, %224 : vector<2x16x16xf32>
    %c4_i32 = arith.constant 4 : i32
    %226 = arith.addi %52, %c4_i32 : i32
    %227 = arith.index_cast %226 : i32 to index
    %228 = memref.load %arg1[%227] : memref<75xf32, #tpu.memory_space<smem>>
    %229 = vector.broadcast %228 : f32 to vector<2x16x16xf32>
    %230 = arith.mulf %229, %15 : vector<2x16x16xf32>
    %c5_i32_69 = arith.constant 5 : i32
    %231 = arith.addi %52, %c5_i32_69 : i32
    %c4_i32_70 = arith.constant 4 : i32
    %232 = arith.addi %231, %c4_i32_70 : i32
    %233 = arith.index_cast %232 : i32 to index
    %234 = memref.load %arg1[%233] : memref<75xf32, #tpu.memory_space<smem>>
    %235 = vector.broadcast %234 : f32 to vector<2x16x16xf32>
    %236 = arith.mulf %235, %27 : vector<2x16x16xf32>
    %237 = arith.addf %230, %236 : vector<2x16x16xf32>
    %c10_i32_71 = arith.constant 10 : i32
    %238 = arith.addi %52, %c10_i32_71 : i32
    %c4_i32_72 = arith.constant 4 : i32
    %239 = arith.addi %238, %c4_i32_72 : i32
    %240 = arith.index_cast %239 : i32 to index
    %241 = memref.load %arg1[%240] : memref<75xf32, #tpu.memory_space<smem>>
    %242 = vector.broadcast %241 : f32 to vector<2x16x16xf32>
    %243 = arith.mulf %242, %1 : vector<2x16x16xf32>
    %244 = arith.addf %237, %243 : vector<2x16x16xf32>
    %c15_i32_73 = arith.constant 15 : i32
    %245 = arith.addi %52, %c15_i32_73 : i32
    %c4_i32_74 = arith.constant 4 : i32
    %246 = arith.addi %245, %c4_i32_74 : i32
    %247 = arith.index_cast %246 : i32 to index
    %248 = memref.load %arg1[%247] : memref<75xf32, #tpu.memory_space<smem>>
    %249 = vector.broadcast %248 : f32 to vector<2x16x16xf32>
    %250 = arith.mulf %249, %39 : vector<2x16x16xf32>
    %251 = arith.addf %244, %250 : vector<2x16x16xf32>
    %c20_i32_75 = arith.constant 20 : i32
    %252 = arith.addi %52, %c20_i32_75 : i32
    %c4_i32_76 = arith.constant 4 : i32
    %253 = arith.addi %252, %c4_i32_76 : i32
    %254 = arith.index_cast %253 : i32 to index
    %255 = memref.load %arg1[%254] : memref<75xf32, #tpu.memory_space<smem>>
    %256 = vector.broadcast %255 : f32 to vector<2x16x16xf32>
    %257 = arith.mulf %256, %51 : vector<2x16x16xf32>
    %258 = arith.addf %251, %257 : vector<2x16x16xf32>
    %c14_i32_77 = arith.constant 14 : i32
    %259 = tpu.dynamic_rotate %258 by %c14_i32_77 dim 2 : vector<2x16x16xf32>, i32 -> vector<2x16x16xf32>
    %c2_i32_78 = arith.constant 2 : i32
    %260 = vector.broadcast %c2_i32_78 : i32 to vector<2x16x16xi32>
    %261 = arith.addi %3, %260 : vector<2x16x16xi32>
    %c0_i32_79 = arith.constant 0 : i32
    %262 = vector.broadcast %c0_i32_79 : i32 to vector<2x16x16xi32>
    %263 = arith.cmpi sge, %261, %262 : vector<2x16x16xi32>
    %c2_i32_80 = arith.constant 2 : i32
    %264 = vector.broadcast %c2_i32_80 : i32 to vector<2x16x16xi32>
    %265 = arith.addi %3, %264 : vector<2x16x16xi32>
    %c16_i32_81 = arith.constant 16 : i32
    %266 = vector.broadcast %c16_i32_81 : i32 to vector<2x16x16xi32>
    %267 = arith.cmpi slt, %265, %266 : vector<2x16x16xi32>
    %268 = arith.andi %263, %267 : vector<2x16x16xi1>
    %cst_82 = arith.constant 0.000000e+00 : f32
    %269 = vector.broadcast %cst_82 : f32 to vector<2x16x16xf32>
    %270 = arith.select %268, %259, %269 : vector<2x16x16xi1>, vector<2x16x16xf32>
    %271 = arith.addf %225, %270 : vector<2x16x16xf32>
    %272 = math.absf %271 : vector<2x16x16xf32>
    %cst_83 = arith.constant 0.000000e+00 : f32
    %273 = vector.broadcast %cst_83 : f32 to vector<2x16x16xf32>
    %274 = arith.subf %273, %272 : vector<2x16x16xf32>
    %275 = math.exp %274 : vector<2x16x16xf32>
    %cst_84 = arith.constant 1.000000e+00 : f32
    %276 = vector.broadcast %cst_84 : f32 to vector<2x16x16xf32>
    %277 = arith.addf %276, %275 : vector<2x16x16xf32>
    %278 = tpu.reciprocal %277 {approx = true} : vector<2x16x16xf32> -> vector<2x16x16xf32>
    %c0_85 = arith.constant 0 : index
    %c0_86 = arith.constant 0 : index
    %c0_87 = arith.constant 0 : index
    %c0_88 = arith.constant 0 : index
    %279 = vector.load %arg3[%c0_85, %c0_86, %c0_87, %c0_88] : memref<2x1x16x16xf32, #tpu.memory_space<vmem>>, vector<2x1x16x16xf32>
    %280 = vector.shape_cast %279 : vector<2x1x16x16xf32> to vector<2x16x16xf32>
    %281 = vector.shape_cast %278 : vector<2x16x16xf32> to vector<2x1x16x16xf32>
    tpu.vector_store %arg3[%c0_85, %c0_86, %c0_87, %c0_88], %281 {strides = array<i32>} : memref<2x1x16x16xf32, #tpu.memory_space<vmem>>, vector<2x1x16x16xf32>,
    return
  }
  func.func @transform_0(%arg0: i32, %arg1: memref<75xf32, #tpu.memory_space<smem>>) -> (i32, i32, i32, i32) {
    %c0_i32 = arith.constant 0 : i32
    %c0_i32_0 = arith.constant 0 : i32
    %c0_i32_1 = arith.constant 0 : i32
    %c0_i32_2 = arith.constant 0 : i32
    return %c0_i32, %arg0, %c0_i32_0, %c0_i32_1 : i32, i32, i32, i32
  }
  func.func @transform_1(%arg0: i32, %arg1: memref<75xf32, #tpu.memory_space<smem>>) -> (i32, i32, i32, i32) {
    %c0_i32 = arith.constant 0 : i32
    %c0_i32_0 = arith.constant 0 : i32
    %c0_i32_1 = arith.constant 0 : i32
    %c0_i32_2 = arith.constant 0 : i32
    return %c0_i32, %arg0, %c0_i32_0, %c0_i32_1 : i32, i32, i32, i32
  }
}

</mosaic_0001>

<llo_original>
// kernel: tpu_custom_call.1
$region0: #{tpu_custom_call.1}
  #allocation0 [shape = 'u32[]', space=smem, size = 0x4, offset = 0x4, fixed_abs, tag = 'smem constant byte address 0x4 - core index']
  #allocation1 [shape = 'u32[144,128]{1,0:T(1,128)}', space=vmem, size = 0x12000, scoped, tag = 'internal scratch']
  #allocation2 [shape = 's32[1]{0}', space=sflag, size = 0x4, scoped, tag = 'scoped memory for tpu_custom_call.1']
  #allocation3 [shape = 'u8[512]{0}', space=smem, size = 0x200, scoped, tag = 'prefetched SMEM operand 0']
  #allocation8 [shape = 's32[]', space=sflag, size = 0x4, offset = 0, fixed_abs, tag = 'sflag constant byte address 0x0 - dummy sync flag']
  #allocation10 [shape = 's32[]', space=sflag, size = 0x4, offset = 0, fixed_abs, tag = 'sflag constant byte address 0x0 - dummy sync flag']
  %s0 = inlined_call_operand.hbm [shape: f32[75], index: 0, kind: input, shape index: {}]
  %s1 = inlined_call_operand.hbm [shape: f32[2,3,16,16], index: 1, kind: input, shape index: {}]
  %s2 = inlined_call_operand.hbm [shape: f32[2,3,16,16], index: 2, kind: output, shape index: {}]
  %s3 = sld [smem:[#allocation0]]
  $region41: #{tpu_custom_call.1} parent=0
    _
  %s5 = ssub.s32 1, %s3
  %s6 = scalar_select 0, %s5, %s3
  %8 = dma.hbm_to_smem %s0, 16, [#allocation3], [#allocation2]
  %9 = dma.done [#allocation2], 16
  %10 = sfence
  $region1: #{tpu_custom_call.1} parent=0
    #allocation4 [shape = 'u8[32768]{0}', space=vmem, size = 0x8000, scoped, tag = 'input window, operand 1']
    #allocation5 [shape = 's32[2]{0}', space=sflag, size = 0x8, scoped, tag = 'scoped memory for tpu_custom_call.1']
    #allocation6 [shape = 's32[2]{0}', space=sflag, size = 0x8, scoped, tag = 'scoped memory for tpu_custom_call.1']
    #allocation7 [shape = 'u8[32768]{0}', space=vmem, size = 0x8000, scoped, tag = 'output window, operand 0']
    %11 = vsyncpa [#allocation5], 0
    %s12 = scalar_lea.sflag [#allocation5], 1
    %13 = vsyncpa %s12, 0
    %14 = vsyncpa [#allocation6], 0
    %s15 = scalar_lea.sflag [#allocation6], 1
    %16 = vsyncpa %s15, 0
    loop: start=0, step=1, limit=5
    $region2: #{tpu_custom_call.1} parent=1 // loop_pre_header
      _
    $region3: #{tpu_custom_call.1} parent=1 // loop_header
      %s18 = sphi 0, %s22
      %p19 = scmp.ge.s32.totalorder %s18, 5
      %s28 = sphi 0, %s30
      %s31 = sphi 0, %s28
      %s32 = sphi 0, %s31
      %s48 = sphi 0, %s32
      %s54 = sphi 0, %s56
      %s57 = sphi 0, %s54
      %s58 = sphi 0, %s57
      %s74 = sphi 0, %s58
    $region4: #{tpu_custom_call.1} parent=1 // loop_header_branch
      %21 = sbr.rel (%p19) target = $region8
    $region5: #{tpu_custom_call.1} parent=1 // loop_body
      %s23 = ssub.s32 %s18, 1
      %s24 = ssub.s32 %s18, 2
      %s25 = sadd.s32 %s18, 1
      %s26 = ssub.s32 %s18, %s25
      %p27 = scmp.eq.s32.totalorder %s26, 0
      %s29 = sadd.s32 %s28, 1
      %s30 = scalar_select %p27, %s28, %s29
      %p33 = pneg %p27
      %p34 = scmp.eq.s32.totalorder %s18, 2
      %p35 = por %p33, %p34
      %p36 = scmp.ne.s32.totalorder %s28, %s31
      %p37 = scmp.eq.s32.totalorder %s18, 0
      %p38 = por %p36, %p37
      %p39 = scmp.ne.s32.totalorder %s28, %s31
      %p40 = scmp.eq.s32.totalorder %s23, 2
      %p41 = por %p39, %p40
      %p42 = scmp.ne.s32.totalorder %s31, %s32
      %p43 = scmp.eq.s32.totalorder %s23, 0
      %p44 = por %p42, %p43
      %p45 = scmp.ne.s32.totalorder %s31, %s32
      %p46 = scmp.eq.s32.totalorder %s24, 2
      %p47 = por %p45, %p46
      %p49 = scmp.ne.s32.totalorder %s32, %s48
      %p50 = scmp.eq.s32.totalorder %s24, 0
      %p51 = por %p49, %p50
      %s52 = ssub.s32 %s18, %s25
      %p53 = scmp.eq.s32.totalorder %s52, 0
      %s55 = sadd.s32 %s54, 1
      %s56 = scalar_select %p53, %s54, %s55
      %p59 = pneg %p53
      %p60 = scmp.eq.s32.totalorder %s18, 2
      %p61 = por %p59, %p60
      %p62 = scmp.ne.s32.totalorder %s54, %s57
      %p63 = scmp.eq.s32.totalorder %s18, 0
      %p64 = por %p62, %p63
      %p65 = scmp.ne.s32.totalorder %s54, %s57
      %p66 = scmp.eq.s32.totalorder %s23, 2
      %p67 = por %p65, %p66
      %p68 = scmp.ne.s32.totalorder %s57, %s58
      %p69 = scmp.eq.s32.totalorder %s23, 0
      %p70 = por %p68, %p69
      %p71 = scmp.ne.s32.totalorder %s57, %s58
      %p72 = scmp.eq.s32.totalorder %s24, 2
      %p73 = por %p71, %p72
      %p75 = scmp.ne.s32.totalorder %s58, %s74
      %p76 = scmp.eq.s32.totalorder %s24, 0
      %p77 = por %p75, %p76
      %p78 = scmp.le.s32.totalorder 1, %s18
      %p79 = scmp.lt.s32.totalorder %s18, 4
      %p80 = pnand %p78, %p79
      %p81 = pneg %p80
      // Predicated region
      $region9: #{tpu_custom_call.1} parent=5 // pred_check
        _
      $region10: #{tpu_custom_call.1} parent=5 // pred_check_branch
        %83 = sbr.rel (%p80) target = $region12
      $region11: #{tpu_custom_call.1} parent=5 // pred_region
        %s84 = ssub.s32 %s18, 1
      $region12: #{tpu_custom_call.1} parent=5 // pred_fallthru
        _
      %p85 = scmp.lt.s32.totalorder %s18, 3
      // Predicated region
      $region13: #{tpu_custom_call.1} parent=5 // pred_check
        %p86 = pneg %p85
      $region14: #{tpu_custom_call.1} parent=5 // pred_check_branch
        %88 = sbr.rel (%p86) target = $region16
      $region15: #{tpu_custom_call.1} parent=5 // pred_region
        // Predicated region
        $region17: #{tpu_custom_call.1} parent=15 // pred_check
          %p89 = pneg %p38
        $region18: #{tpu_custom_call.1} parent=15 // pred_check_branch
          %91 = sbr.rel (%p89) target = $region20
        $region19: #{tpu_custom_call.1} parent=15 // pred_region
          #allocation9 [shape = 'u32[6]{0}', space=smem, size = 0x18, scoped, tag = 'DMA stride descriptor']
          %s92 = sand.u32 %s28, 1
          %s93 = scalar_lea.sflag [#allocation5], %s92
          %s94 = sand.u32 %s28, 1
          %s95 = smul.addr %s94, 32
          %s96 = scalar_lea.vmem [#allocation4], %s95
          %s98 = ssub.s32 512, 512
          %99 = vsyncadd %s93, %s98
          %s100 = smul.addr %s18, 2
          %s101 = smul.addr %s100, 128
          %s102 = scalar_lea.hbm %s1, %s101
          %s104 = sshll.u32 1, 14
          %s105 = sxor.u32 4294967295, %s104
          %s107 = sld [smem:[#allocation0]]
          %s108 = sadd.s32 2, %s107
          %s110 = sshll.u32 7, 26
          %s111 = sxor.u32 4294967295, %s110
          %s112 = sand.u32 0, %s111
          %s113 = sshll.u32 %s108, 26
          %s114 = sor.u32 %s112, %s113
          %s115 = sshll.u32 %s96, 4
          %s116 = int_to_ptr.vmem [resolvable:$true] %s115
          %122 = sst [smem:[#allocation9]] 768
          %s123 = scalar_lea.smem [#allocation9], 1
          %124 = sst [smem:[%s123]] 256
          %s125 = scalar_lea.smem [#allocation9], 2
          %126 = sst [smem:[%s125]] 2
          %s127 = scalar_lea.smem [#allocation9], 3
          %128 = sst [smem:[%s127]] 128
          %s129 = scalar_lea.smem [#allocation9], 4
          %130 = sst [smem:[%s129]] 128
          %s131 = scalar_lea.smem [#allocation9], 5
          %132 = sst [smem:[%s131]] 8
          %134 = dma.general %s102, 512, %s116, %s93, 131072, [#allocation9], %s114, 0
        $region20: #{tpu_custom_call.1} parent=15 // pred_fallthru
          _
      $region16: #{tpu_custom_call.1} parent=5 // pred_fallthru
        _
      %p135 = scmp.le.s32.totalorder 1, %s18
      %p136 = scmp.lt.s32.totalorder %s18, 4
      %p137 = pnand %p135, %p136
      %p138 = pneg %p137
      // Predicated region
      $region21: #{tpu_custom_call.1} parent=5 // pred_check
        _
      $region22: #{tpu_custom_call.1} parent=5 // pred_check_branch
        %140 = sbr.rel (%p137) target = $region24
      $region23: #{tpu_custom_call.1} parent=5 // pred_region
        %s141 = ssub.s32 %s18, 1
        %s142 = sand.u32 %s31, 1
        %s143 = scalar_lea.sflag [#allocation5], %s142
        %s144 = sand.u32 %s31, 1
        %s145 = smul.addr %s144, 32
        %s146 = scalar_lea.vmem [#allocation4], %s145
        // Predicated region
        $region25: #{tpu_custom_call.1} parent=23 // pred_check
          %p147 = pneg %p44
        $region26: #{tpu_custom_call.1} parent=23 // pred_check_branch
          %149 = sbr.rel (%p147) target = $region28
        $region27: #{tpu_custom_call.1} parent=23 // pred_region
          %150 = dma.done %s143, 512
        $region28: #{tpu_custom_call.1} parent=23 // pred_fallthru
          _
        %s151 = sand.u32 %s31, 1
        %s152 = scalar_lea.sflag [#allocation5], %s151
        %s153 = sand.u32 %s31, 1
        %s154 = smul.addr %s153, 32
        %s155 = scalar_lea.vmem [#allocation4], %s154
        %p156 = pneg %p44
        %p157 = pneg %p41
        %p158 = pneg %p70
        %p159 = pneg %p67
        %s160 = sand.u32 %s57, 1
        %s161 = scalar_lea.sflag [#allocation6], %s160
        %s162 = sand.u32 %s57, 1
        %s163 = smul.addr %s162, 32
        %s164 = scalar_lea.vmem [#allocation7], %s163
        %v165 = vld [vmem:[%s146] sm:$0xff]
        %v166 = vld [vmem:[%s146 + $0x8] sm:$0xff]
        %v167 = vld [vmem:[%s146 + $0x10] sm:$0xff]
        %v168 = vld [vmem:[%s146 + $0x18] sm:$0xff]
        %v169 = vlaneseq
        %v170 = vshrl.u32 %v169, 7
        %v171 = vadd.s32 %v170, 8
        %v172 = vlaneseq
        %v173 = vand.u32 %v172, 127
        %v174 = vrot.slane %v165, 6
        %v175 = vrot.slane %v167, 6
        %v176 = vrot.slane %v166, 6
        %v177 = vrot.slane %v168, 6
        %vm178 = vcmp.lt.s32.totalorder %v170, 2
        %v179 = vsel %vm178, %v174, %v176
        %v180 = vsel %vm178, %v175, %v177
        %v181 = vsel %vm178, %v176, %v174
        %v182 = vsel %vm178, %v177, %v175
        %v183 = vadd.s32 %v170, 4294967294
        %v184 = vadd.s32 %v171, 4294967294
        %vm185 = vcmp.ge.s32.totalorder %v183, 0
        %vm186 = vcmp.ge.s32.totalorder %v184, 0
        %vm187 = vcmp.lt.s32.totalorder %v183, 16
        %vm188 = vcmp.lt.s32.totalorder %v184, 16
        %vm189 = vmand %vm185, %vm187
        %vm190 = vmand %vm186, %vm188
        %v191 = vsel %vm189, %v181, 0.0
        %v192 = vsel %vm190, %v179, 0.0
        %v193 = vsel %vm189, %v182, 0.0
        %v194 = vsel %vm190, %v180, 0.0
        %v195 = vrot.slane %v165, 7
        %v196 = vrot.slane %v167, 7
        %v197 = vrot.slane %v166, 7
        %v198 = vrot.slane %v168, 7
        %vm199 = vcmp.lt.s32.totalorder %v170, 1
        %v200 = vsel %vm199, %v195, %v197
        %v201 = vsel %vm199, %v196, %v198
        %v202 = vsel %vm199, %v197, %v195
        %v203 = vsel %vm199, %v198, %v196
        %v204 = vadd.s32 %v170, 4294967295
        %v205 = vadd.s32 %v171, 4294967295
        %vm206 = vcmp.ge.s32.totalorder %v204, 0
        %vm207 = vcmp.ge.s32.totalorder %v205, 0
        %vm208 = vcmp.lt.s32.totalorder %v204, 16
        %vm209 = vcmp.lt.s32.totalorder %v205, 16
        %vm210 = vmand %vm206, %vm208
        %vm211 = vmand %vm207, %vm209
        %v212 = vsel %vm210, %v202, 0.0
        %v213 = vsel %vm211, %v200, 0.0
        %v214 = vsel %vm210, %v203, 0.0
        %v215 = vsel %vm211, %v201, 0.0
        %v216 = vrot.slane %v165, 1
        %v217 = vrot.slane %v167, 1
        %v218 = vrot.slane %v166, 1
        %v219 = vrot.slane %v168, 1
        %vm220 = vcmp.lt.s32.totalorder %v170, 7
        %v221 = vsel %vm220, %v216, %v218
        %v222 = vsel %vm220, %v217, %v219
        %v223 = vsel %vm220, %v218, %v216
        %v224 = vsel %vm220, %v219, %v217
        %v225 = vadd.s32 %v170, 1
        %v226 = vadd.s32 %v171, 1
        %vm227 = vcmp.ge.s32.totalorder %v225, 0
        %vm228 = vcmp.ge.s32.totalorder %v226, 0
        %vm229 = vcmp.lt.s32.totalorder %v225, 16
        %vm230 = vcmp.lt.s32.totalorder %v226, 16
        %vm231 = vmand %vm227, %vm229
        %vm232 = vmand %vm228, %vm230
        %v233 = vsel %vm231, %v221, 0.0
        %v234 = vsel %vm232, %v223, 0.0
        %v235 = vsel %vm231, %v222, 0.0
        %v236 = vsel %vm232, %v224, 0.0
        %v237 = vrot.slane %v165, 2
        %v238 = vrot.slane %v167, 2
        %v239 = vrot.slane %v166, 2
        %v240 = vrot.slane %v168, 2
        %vm241 = vcmp.lt.s32.totalorder %v170, 6
        %v242 = vsel %vm241, %v237, %v239
        %v243 = vsel %vm241, %v238, %v240
        %v244 = vsel %vm241, %v239, %v237
        %v245 = vsel %vm241, %v240, %v238
        %v246 = vadd.s32 %v170, 2
        %v247 = vadd.s32 %v171, 2
        %vm248 = vcmp.ge.s32.totalorder %v246, 0
        %vm249 = vcmp.ge.s32.totalorder %v247, 0
        %vm250 = vcmp.lt.s32.totalorder %v246, 16
        %vm251 = vcmp.lt.s32.totalorder %v247, 16
        %vm252 = vmand %vm248, %vm250
        %vm253 = vmand %vm249, %vm251
        %v254 = vsel %vm252, %v242, 0.0
        %v255 = vsel %vm253, %v244, 0.0
        %v256 = vsel %vm252, %v243, 0.0
        %v257 = vsel %vm253, %v245, 0.0
        %s258 = smul.u32 %s23, 25
        %s259 = sld [smem:[#allocation3 + %s258]]
        %v260 = vstv %s259
        %v261 = vmul.f32 %v260, %v191
        %v262 = vmul.f32 %v260, %v192
        %v263 = vmul.f32 %v260, %v193
        %v264 = vmul.f32 %v260, %v194
        %s265 = sadd.s32 %s258, 5
        %s266 = sld [smem:[#allocation3 + %s265]]
        %v267 = vstv %s266
        %v268 = vmul.f32 %v267, %v212
        %v269 = vmul.f32 %v267, %v213
        %v270 = vmul.f32 %v267, %v214
        %v271 = vmul.f32 %v267, %v215
        %v272 = vadd.f32 %v261, %v268
        %v273 = vadd.f32 %v262, %v269
        %v274 = vadd.f32 %v263, %v270
        %v275 = vadd.f32 %v264, %v271
        %s276 = sadd.s32 %s258, 10
        %s277 = sld [smem:[#allocation3 + %s276]]
        %v278 = vstv %s277
        %v279 = vmul.f32 %v278, %v165
        %v280 = vmul.f32 %v278, %v166
        %v281 = vmul.f32 %v278, %v167
        %v282 = vmul.f32 %v278, %v168
        %v283 = vadd.f32 %v272, %v279
        %v284 = vadd.f32 %v273, %v280
        %v285 = vadd.f32 %v274, %v281
        %v286 = vadd.f32 %v275, %v282
        %s287 = sadd.s32 %s258, 15
        %s288 = sld [smem:[#allocation3 + %s287]]
        %v289 = vstv %s288
        %v290 = vmul.f32 %v289, %v233
        %v291 = vmul.f32 %v289, %v234
        %v292 = vmul.f32 %v289, %v235
        %v293 = vmul.f32 %v289, %v236
        %v294 = vadd.f32 %v283, %v290
        %v295 = vadd.f32 %v284, %v291
        %v296 = vadd.f32 %v285, %v292
        %v297 = vadd.f32 %v286, %v293
        %s298 = sadd.s32 %s258, 20
        %s299 = sld [smem:[#allocation3 + %s298]]
        %v300 = vstv %s299
        %v301 = vmul.f32 %v300, %v254
        %v302 = vmul.f32 %v300, %v255
        %v303 = vmul.f32 %v300, %v256
        %v304 = vmul.f32 %v300, %v257
        %v305 = vadd.f32 %v294, %v301
        %v306 = vadd.f32 %v295, %v302
        %v307 = vadd.f32 %v296, %v303
        %v308 = vadd.f32 %v297, %v304
        %vm309 = vcmask 1047680
        %310 = vrot.lane.b32.xlu0 %v305, 16
        %v311 = vpop.permute.xlu0 %310
        %v312 = vsel %vm309, %v311, %v305
        %313 = vrot.lane.b32.xlu0 %v306, 16
        %v314 = vpop.permute.xlu0 %313
        %v315 = vsel %vm309, %v314, %v306
        %316 = vrot.lane.b32.xlu0 %v307, 16
        %v317 = vpop.permute.xlu0 %316
        %v318 = vsel %vm309, %v317, %v307
        %319 = vrot.lane.b32.xlu0 %v308, 16
        %v320 = vpop.permute.xlu0 %319
        %v321 = vsel %vm309, %v320, %v308
        %322 = vrot.lane.b32.xlu0 %v312, 16
        %v323 = vpop.permute.xlu0 %322
        %324 = vrot.lane.b32.xlu0 %v315, 16
        %v325 = vpop.permute.xlu0 %324
        %326 = vrot.lane.b32.xlu0 %v318, 16
        %v327 = vpop.permute.xlu0 %326
        %328 = vrot.lane.b32.xlu0 %v321, 16
        %v329 = vpop.permute.xlu0 %328
        %v330 = vsel %vm309, %v323, %v305
        %v331 = vsel %vm309, %v325, %v306
        %v332 = vsel %vm309, %v327, %v307
        %v333 = vsel %vm309, %v329, %v308
        %v334 = vadd.s32 %v173, 4294967294
        %vm335 = vcmp.ge.s32.totalorder %v334, 0
        %vm336 = vcmp.lt.s32.totalorder %v334, 16
        %vm337 = vmand %vm335, %vm336
        %342 = vrot.lane.b32.xlu0 %v330, 114
        %v343 = vpop.permute.xlu0 %342
        %344 = vrot.lane.b32.xlu0 %v331, 114
        %v345 = vpop.permute.xlu0 %344
        %346 = vrot.lane.b32.xlu0 %v332, 114
        %v347 = vpop.permute.xlu0 %346
        %348 = vrot.lane.b32.xlu0 %v333, 114
        %v349 = vpop.permute.xlu0 %348
        %v354 = vsel %vm337, %v343, 0.0
        %v355 = vsel %vm337, %v345, 0.0
        %v356 = vsel %vm337, %v347, 0.0
        %v357 = vsel %vm337, %v349, 0.0
        %v358 = vadd.f32 %v354, 0.0
        %v359 = vadd.f32 %v355, 0.0
        %v360 = vadd.f32 %v356, 0.0
        %v361 = vadd.f32 %v357, 0.0
        %s362 = sadd.s32 %s258, 1
        %s363 = sld [smem:[#allocation3 + %s362]]
        %v364 = vstv %s363
        %v365 = vmul.f32 %v364, %v191
        %v366 = vmul.f32 %v364, %v192
        %v367 = vmul.f32 %v364, %v193
        %v368 = vmul.f32 %v364, %v194
        %s369 = sadd.s32 %s258, 6
        %s370 = sld [smem:[#allocation3 + %s369]]
        %v371 = vstv %s370
        %v372 = vmul.f32 %v371, %v212
        %v373 = vmul.f32 %v371, %v213
        %v374 = vmul.f32 %v371, %v214
        %v375 = vmul.f32 %v371, %v215
        %v376 = vadd.f32 %v365, %v372
        %v377 = vadd.f32 %v366, %v373
        %v378 = vadd.f32 %v367, %v374
        %v379 = vadd.f32 %v368, %v375
        %s380 = sadd.s32 %s258, 11
        %s381 = sld [smem:[#allocation3 + %s380]]
        %v382 = vstv %s381
        %v383 = vmul.f32 %v382, %v165
        %v384 = vmul.f32 %v382, %v166
        %v385 = vmul.f32 %v382, %v167
        %v386 = vmul.f32 %v382, %v168
        %v387 = vadd.f32 %v376, %v383
        %v388 = vadd.f32 %v377, %v384
        %v389 = vadd.f32 %v378, %v385
        %v390 = vadd.f32 %v379, %v386
        %s391 = sadd.s32 %s258, 16
        %s392 = sld [smem:[#allocation3 + %s391]]
        %v393 = vstv %s392
        %v394 = vmul.f32 %v393, %v233
        %v395 = vmul.f32 %v393, %v234
        %v396 = vmul.f32 %v393, %v235
        %v397 = vmul.f32 %v393, %v236
        %v398 = vadd.f32 %v387, %v394
        %v399 = vadd.f32 %v388, %v395
        %v400 = vadd.f32 %v389, %v396
        %v401 = vadd.f32 %v390, %v397
        %s402 = sadd.s32 %s258, 21
        %s403 = sld [smem:[#allocation3 + %s402]]
        %v404 = vstv %s403
        %v405 = vmul.f32 %v404, %v254
        %v406 = vmul.f32 %v404, %v255
        %v407 = vmul.f32 %v404, %v256
        %v408 = vmul.f32 %v404, %v257
        %v409 = vadd.f32 %v398, %v405
        %v410 = vadd.f32 %v399, %v406
        %v411 = vadd.f32 %v400, %v407
        %v412 = vadd.f32 %v401, %v408
        %413 = vrot.lane.b32.xlu0 %v409, 16
        %v414 = vpop.permute.xlu0 %413
        %v415 = vsel %vm309, %v414, %v409
        %416 = vrot.lane.b32.xlu0 %v410, 16
        %v417 = vpop.permute.xlu0 %416
        %v418 = vsel %vm309, %v417, %v410
        %419 = vrot.lane.b32.xlu0 %v411, 16
        %v420 = vpop.permute.xlu0 %419
        %v421 = vsel %vm309, %v420, %v411
        %422 = vrot.lane.b32.xlu0 %v412, 16
        %v423 = vpop.permute.xlu0 %422
        %v424 = vsel %vm309, %v423, %v412
        %425 = vrot.lane.b32.xlu0 %v415, 16
        %v426 = vpop.permute.xlu0 %425
        %427 = vrot.lane.b32.xlu0 %v418, 16
        %v428 = vpop.permute.xlu0 %427
        %429 = vrot.lane.b32.xlu0 %v421, 16
        %v430 = vpop.permute.xlu0 %429
        %431 = vrot.lane.b32.xlu0 %v424, 16
        %v432 = vpop.permute.xlu0 %431
        %v433 = vsel %vm309, %v426, %v409
        %v434 = vsel %vm309, %v428, %v410
        %v435 = vsel %vm309, %v430, %v411
        %v436 = vsel %vm309, %v432, %v412
        %v437 = vadd.s32 %v173, 4294967295
        %vm438 = vcmp.ge.s32.totalorder %v437, 0
        %vm439 = vcmp.lt.s32.totalorder %v437, 16
        %vm440 = vmand %vm438, %vm439
        %445 = vrot.lane.b32.xlu0 %v433, 113
        %v446 = vpop.permute.xlu0 %445
        %447 = vrot.lane.b32.xlu0 %v434, 113
        %v448 = vpop.permute.xlu0 %447
        %449 = vrot.lane.b32.xlu0 %v435, 113
        %v450 = vpop.permute.xlu0 %449
        %451 = vrot.lane.b32.xlu0 %v436, 113
        %v452 = vpop.permute.xlu0 %451
        %v457 = vsel %vm440, %v446, 0.0
        %v458 = vsel %vm440, %v448, 0.0
        %v459 = vsel %vm440, %v450, 0.0
        %v460 = vsel %vm440, %v452, 0.0
        %v461 = vadd.f32 %v358, %v457
        %v462 = vadd.f32 %v359, %v458
        %v463 = vadd.f32 %v360, %v459
        %v464 = vadd.f32 %v361, %v460
        %s465 = sadd.s32 %s258, 2
        %s466 = sld [smem:[#allocation3 + %s465]]
        %v467 = vstv %s466
        %v468 = vmul.f32 %v467, %v191
        %v469 = vmul.f32 %v467, %v192
        %v470 = vmul.f32 %v467, %v193
        %v471 = vmul.f32 %v467, %v194
        %s472 = sadd.s32 %s258, 7
        %s473 = sld [smem:[#allocation3 + %s472]]
        %v474 = vstv %s473
        %v475 = vmul.f32 %v474, %v212
        %v476 = vmul.f32 %v474, %v213
        %v477 = vmul.f32 %v474, %v214
        %v478 = vmul.f32 %v474, %v215
        %v479 = vadd.f32 %v468, %v475
        %v480 = vadd.f32 %v469, %v476
        %v481 = vadd.f32 %v470, %v477
        %v482 = vadd.f32 %v471, %v478
        %s483 = sadd.s32 %s258, 12
        %s484 = sld [smem:[#allocation3 + %s483]]
        %v485 = vstv %s484
        %v486 = vmul.f32 %v485, %v165
        %v487 = vmul.f32 %v485, %v166
        %v488 = vmul.f32 %v485, %v167
        %v489 = vmul.f32 %v485, %v168
        %v490 = vadd.f32 %v479, %v486
        %v491 = vadd.f32 %v480, %v487
        %v492 = vadd.f32 %v481, %v488
        %v493 = vadd.f32 %v482, %v489
        %s494 = sadd.s32 %s258, 17
        %s495 = sld [smem:[#allocation3 + %s494]]
        %v496 = vstv %s495
        %v497 = vmul.f32 %v496, %v233
        %v498 = vmul.f32 %v496, %v234
        %v499 = vmul.f32 %v496, %v235
        %v500 = vmul.f32 %v496, %v236
        %v501 = vadd.f32 %v490, %v497
        %v502 = vadd.f32 %v491, %v498
        %v503 = vadd.f32 %v492, %v499
        %v504 = vadd.f32 %v493, %v500
        %s505 = sadd.s32 %s258, 22
        %s506 = sld [smem:[#allocation3 + %s505]]
        %v507 = vstv %s506
        %v508 = vmul.f32 %v507, %v254
        %v509 = vmul.f32 %v507, %v255
        %v510 = vmul.f32 %v507, %v256
        %v511 = vmul.f32 %v507, %v257
        %v512 = vadd.f32 %v501, %v508
        %v513 = vadd.f32 %v502, %v509
        %v514 = vadd.f32 %v503, %v510
        %v515 = vadd.f32 %v504, %v511
        %v516 = vadd.f32 %v461, %v512
        %v517 = vadd.f32 %v462, %v513
        %v518 = vadd.f32 %v463, %v514
        %v519 = vadd.f32 %v464, %v515
        %s520 = sadd.s32 %s258, 3
        %s521 = sld [smem:[#allocation3 + %s520]]
        %v522 = vstv %s521
        %v523 = vmul.f32 %v522, %v191
        %v524 = vmul.f32 %v522, %v192
        %v525 = vmul.f32 %v522, %v193
        %v526 = vmul.f32 %v522, %v194
        %s527 = sadd.s32 %s258, 8
        %s528 = sld [smem:[#allocation3 + %s527]]
        %v529 = vstv %s528
        %v530 = vmul.f32 %v529, %v212
        %v531 = vmul.f32 %v529, %v213
        %v532 = vmul.f32 %v529, %v214
        %v533 = vmul.f32 %v529, %v215
        %v534 = vadd.f32 %v523, %v530
        %v535 = vadd.f32 %v524, %v531
        %v536 = vadd.f32 %v525, %v532
        %v537 = vadd.f32 %v526, %v533
        %s538 = sadd.s32 %s258, 13
        %s539 = sld [smem:[#allocation3 + %s538]]
        %v540 = vstv %s539
        %v541 = vmul.f32 %v540, %v165
        %v542 = vmul.f32 %v540, %v166
        %v543 = vmul.f32 %v540, %v167
        %v544 = vmul.f32 %v540, %v168
        %v545 = vadd.f32 %v534, %v541
        %v546 = vadd.f32 %v535, %v542
        %v547 = vadd.f32 %v536, %v543
        %v548 = vadd.f32 %v537, %v544
        %s549 = sadd.s32 %s258, 18
        %s550 = sld [smem:[#allocation3 + %s549]]
        %v551 = vstv %s550
        %v552 = vmul.f32 %v551, %v233
        %v553 = vmul.f32 %v551, %v234
        %v554 = vmul.f32 %v551, %v235
        %v555 = vmul.f32 %v551, %v236
        %v556 = vadd.f32 %v545, %v552
        %v557 = vadd.f32 %v546, %v553
        %v558 = vadd.f32 %v547, %v554
        %v559 = vadd.f32 %v548, %v555
        %s560 = sadd.s32 %s258, 23
        %s561 = sld [smem:[#allocation3 + %s560]]
        %v562 = vstv %s561
        %v563 = vmul.f32 %v562, %v254
        %v564 = vmul.f32 %v562, %v255
        %v565 = vmul.f32 %v562, %v256
        %v566 = vmul.f32 %v562, %v257
        %v567 = vadd.f32 %v556, %v563
        %v568 = vadd.f32 %v557, %v564
        %v569 = vadd.f32 %v558, %v565
        %v570 = vadd.f32 %v559, %v566
        %571 = vrot.lane.b32.xlu0 %v567, 16
        %v572 = vpop.permute.xlu0 %571
        %v573 = vsel %vm309, %v572, %v567
        %574 = vrot.lane.b32.xlu0 %v568, 16
        %v575 = vpop.permute.xlu0 %574
        %v576 = vsel %vm309, %v575, %v568
        %577 = vrot.lane.b32.xlu0 %v569, 16
        %v578 = vpop.permute.xlu0 %577
        %v579 = vsel %vm309, %v578, %v569
        %580 = vrot.lane.b32.xlu0 %v570, 16
        %v581 = vpop.permute.xlu0 %580
        %v582 = vsel %vm309, %v581, %v570
        %583 = vrot.lane.b32.xlu0 %v573, 16
        %v584 = vpop.permute.xlu0 %583
        %585 = vrot.lane.b32.xlu0 %v576, 16
        %v586 = vpop.permute.xlu0 %585
        %587 = vrot.lane.b32.xlu0 %v579, 16
        %v588 = vpop.permute.xlu0 %587
        %589 = vrot.lane.b32.xlu0 %v582, 16
        %v590 = vpop.permute.xlu0 %589
        %v591 = vsel %vm309, %v584, %v567
        %v592 = vsel %vm309, %v586, %v568
        %v593 = vsel %vm309, %v588, %v569
        %v594 = vsel %vm309, %v590, %v570
        %v595 = vadd.s32 %v173, 1
        %vm596 = vcmp.ge.s32.totalorder %v595, 0
        %vm597 = vcmp.lt.s32.totalorder %v595, 16
        %vm598 = vmand %vm596, %vm597
        %603 = vrot.lane.b32.xlu0 %v591, 127
        %v604 = vpop.permute.xlu0 %603
        %605 = vrot.lane.b32.xlu0 %v592, 127
        %v606 = vpop.permute.xlu0 %605
        %607 = vrot.lane.b32.xlu0 %v593, 127
        %v608 = vpop.permute.xlu0 %607
        %609 = vrot.lane.b32.xlu0 %v594, 127
        %v610 = vpop.permute.xlu0 %609
        %v615 = vsel %vm598, %v604, 0.0
        %v616 = vsel %vm598, %v606, 0.0
        %v617 = vsel %vm598, %v608, 0.0
        %v618 = vsel %vm598, %v610, 0.0
        %v619 = vadd.f32 %v516, %v615
        %v620 = vadd.f32 %v517, %v616
        %v621 = vadd.f32 %v518, %v617
        %v622 = vadd.f32 %v519, %v618
        %s623 = sadd.s32 %s258, 4
        %s624 = sld [smem:[#allocation3 + %s623]]
        %v625 = vstv %s624
        %v626 = vmul.f32 %v625, %v191
        %v627 = vmul.f32 %v625, %v192
        %v628 = vmul.f32 %v625, %v193
        %v629 = vmul.f32 %v625, %v194
        %s630 = sadd.s32 %s258, 9
        %s631 = sld [smem:[#allocation3 + %s630]]
        %v632 = vstv %s631
        %v633 = vmul.f32 %v632, %v212
        %v634 = vmul.f32 %v632, %v213
        %v635 = vmul.f32 %v632, %v214
        %v636 = vmul.f32 %v632, %v215
        %v637 = vadd.f32 %v626, %v633
        %v638 = vadd.f32 %v627, %v634
        %v639 = vadd.f32 %v628, %v635
        %v640 = vadd.f32 %v629, %v636
        %s641 = sadd.s32 %s258, 14
        %s642 = sld [smem:[#allocation3 + %s641]]
        %v643 = vstv %s642
        %v644 = vmul.f32 %v643, %v165
        %v645 = vmul.f32 %v643, %v166
        %v646 = vmul.f32 %v643, %v167
        %v647 = vmul.f32 %v643, %v168
        %v648 = vadd.f32 %v637, %v644
        %v649 = vadd.f32 %v638, %v645
        %v650 = vadd.f32 %v639, %v646
        %v651 = vadd.f32 %v640, %v647
        %s652 = sadd.s32 %s258, 19
        %s653 = sld [smem:[#allocation3 + %s652]]
        %v654 = vstv %s653
        %v655 = vmul.f32 %v654, %v233
        %v656 = vmul.f32 %v654, %v234
        %v657 = vmul.f32 %v654, %v235
        %v658 = vmul.f32 %v654, %v236
        %v659 = vadd.f32 %v648, %v655
        %v660 = vadd.f32 %v649, %v656
        %v661 = vadd.f32 %v650, %v657
        %v662 = vadd.f32 %v651, %v658
        %s663 = sadd.s32 %s258, 24
        %s664 = sld [smem:[#allocation3 + %s663]]
        %v665 = vstv %s664
        %v666 = vmul.f32 %v665, %v254
        %v667 = vmul.f32 %v665, %v255
        %v668 = vmul.f32 %v665, %v256
        %v669 = vmul.f32 %v665, %v257
        %v670 = vadd.f32 %v659, %v666
        %v671 = vadd.f32 %v660, %v667
        %v672 = vadd.f32 %v661, %v668
        %v673 = vadd.f32 %v662, %v669
        %674 = vrot.lane.b32.xlu0 %v670, 16
        %v675 = vpop.permute.xlu0 %674
        %v676 = vsel %vm309, %v675, %v670
        %677 = vrot.lane.b32.xlu0 %v671, 16
        %v678 = vpop.permute.xlu0 %677
        %v679 = vsel %vm309, %v678, %v671
        %680 = vrot.lane.b32.xlu0 %v672, 16
        %v681 = vpop.permute.xlu0 %680
        %v682 = vsel %vm309, %v681, %v672
        %683 = vrot.lane.b32.xlu0 %v673, 16
        %v684 = vpop.permute.xlu0 %683
        %v685 = vsel %vm309, %v684, %v673
        %686 = vrot.lane.b32.xlu0 %v676, 16
        %v687 = vpop.permute.xlu0 %686
        %688 = vrot.lane.b32.xlu0 %v679, 16
        %v689 = vpop.permute.xlu0 %688
        %690 = vrot.lane.b32.xlu0 %v682, 16
        %v691 = vpop.permute.xlu0 %690
        %692 = vrot.lane.b32.xlu0 %v685, 16
        %v693 = vpop.permute.xlu0 %692
        %v694 = vsel %vm309, %v687, %v670
        %v695 = vsel %vm309, %v689, %v671
        %v696 = vsel %vm309, %v691, %v672
        %v697 = vsel %vm309, %v693, %v673
        %v698 = vadd.s32 %v173, 2
        %vm699 = vcmp.ge.s32.totalorder %v698, 0
        %vm700 = vcmp.lt.s32.totalorder %v698, 16
        %vm701 = vmand %vm699, %vm700
        %706 = vrot.lane.b32.xlu0 %v694, 126
        %v707 = vpop.permute.xlu0 %706
        %708 = vrot.lane.b32.xlu0 %v695, 126
        %v709 = vpop.permute.xlu0 %708
        %710 = vrot.lane.b32.xlu0 %v696, 126
        %v711 = vpop.permute.xlu0 %710
        %712 = vrot.lane.b32.xlu0 %v697, 126
        %v713 = vpop.permute.xlu0 %712
        %v718 = vsel %vm701, %v707, 0.0
        %v719 = vsel %vm701, %v709, 0.0
        %v720 = vsel %vm701, %v711, 0.0
        %v721 = vsel %vm701, %v713, 0.0
        %v722 = vadd.f32 %v619, %v718
        %v723 = vadd.f32 %v620, %v719
        %v724 = vadd.f32 %v621, %v720
        %v725 = vadd.f32 %v622, %v721
        %v726 = vand.u32 2147483647, %v722
        %v727 = vand.u32 2147483647, %v723
        %v728 = vand.u32 2147483647, %v724
        %v729 = vand.u32 2147483647, %v725
        %v730 = vsub.f32 0.0, %v726
        %v731 = vsub.f32 0.0, %v727
        %v732 = vsub.f32 0.0, %v728
        %v733 = vsub.f32 0.0, %v729
        %v734 = vmul.f32 %v730, 1.442695
        %v735 = vpow.pop %v734
        %v736 = vmul.f32 %v731, 1.442695
        %v737 = vpow.pop %v736
        %v738 = vmul.f32 %v732, 1.442695
        %v739 = vpow.pop %v738
        %v740 = vmul.f32 %v733, 1.442695
        %v741 = vpow.pop %v740
        %v742 = vadd.f32 %v735, 1.0
        %v743 = vadd.f32 %v737, 1.0
        %v744 = vadd.f32 %v739, 1.0
        %v745 = vadd.f32 %v741, 1.0
        %v746 = vrcp.pop %v742
        %v747 = vrcp.pop %v743
        %v748 = vrcp.pop %v744
        %v749 = vrcp.pop %v745
        %vm750 = vcmask 130048
        %751 = vst.msk [vmem:[%s164] sm:$0xff] %vm750, %v746
        %752 = vst.msk [vmem:[%s164 + $0x8] sm:$0xff] %vm750, %v747
        %753 = vst.msk [vmem:[%s164 + $0x10] sm:$0xff] %vm750, %v748
        %754 = vst.msk [vmem:[%s164 + $0x18] sm:$0xff] %vm750, %v749
        %s755 = sand.u32 %s57, 1
        %s756 = scalar_lea.sflag [#allocation6], %s755
        %s757 = sand.u32 %s57, 1
        %s758 = smul.addr %s757, 32
        %s759 = scalar_lea.vmem [#allocation7], %s758
        // Predicated region
        $region29: #{tpu_custom_call.1} parent=23 // pred_check
          %p760 = pneg %p67
        $region30: #{tpu_custom_call.1} parent=23 // pred_check_branch
          %762 = sbr.rel (%p760) target = $region32
        $region31: #{tpu_custom_call.1} parent=23 // pred_region
          #allocation11 [shape = 'u32[6]{0}', space=smem, size = 0x18, scoped, tag = 'DMA stride descriptor']
          %s764 = ssub.s32 512, 512
          %765 = vsyncadd %s756, %s764
          %s766 = smul.addr %s23, 2
          %s767 = smul.addr %s766, 128
          %s768 = scalar_lea.hbm %s2, %s767
          %s770 = sshll.u32 1, 14
          %s771 = sxor.u32 4294967295, %s770
          %s774 = sshll.u32 7, 18
          %s775 = sxor.u32 4294967295, %s774
          %s776 = sand.u32 0, %s775
          %s778 = sor.u32 %s776, 0
          %s779 = sshll.u32 %s759, 4
          %s780 = int_to_ptr.vmem [resolvable:$true] %s779
          %786 = sst [smem:[#allocation11]] 256
          %s787 = scalar_lea.smem [#allocation11], 1
          %788 = sst [smem:[%s787]] 768
          %s789 = scalar_lea.smem [#allocation11], 2
          %790 = sst [smem:[%s789]] 2
          %s791 = scalar_lea.smem [#allocation11], 3
          %792 = sst [smem:[%s791]] 128
          %s793 = scalar_lea.smem [#allocation11], 4
          %794 = sst [smem:[%s793]] 128
          %s795 = scalar_lea.smem [#allocation11], 5
          %796 = sst [smem:[%s795]] 8
          %798 = dma.general %s780, 512, %s768, %s756, 131072, [#allocation11], %s778, 0
        $region32: #{tpu_custom_call.1} parent=23 // pred_fallthru
          _
      $region24: #{tpu_custom_call.1} parent=5 // pred_fallthru
        _
      %p799 = scmp.le.s32.totalorder 2, %s18
      // Predicated region
      $region33: #{tpu_custom_call.1} parent=5 // pred_check
        %p800 = pneg %p799
      $region34: #{tpu_custom_call.1} parent=5 // pred_check_branch
        %802 = sbr.rel (%p800) target = $region36
      $region35: #{tpu_custom_call.1} parent=5 // pred_region
        %s803 = ssub.s32 %s18, 2
        // Predicated region
        $region37: #{tpu_custom_call.1} parent=35 // pred_check
          %p804 = pneg %p73
        $region38: #{tpu_custom_call.1} parent=35 // pred_check_branch
          %806 = sbr.rel (%p804) target = $region40
        $region39: #{tpu_custom_call.1} parent=35 // pred_region
          %s807 = sand.u32 %s58, 1
          %s808 = scalar_lea.sflag [#allocation6], %s807
          %s809 = sand.u32 %s58, 1
          %s810 = smul.addr %s809, 32
          %s811 = scalar_lea.vmem [#allocation7], %s810
          %812 = dma.done %s808, 512
        $region40: #{tpu_custom_call.1} parent=35 // pred_fallthru
          _
      $region36: #{tpu_custom_call.1} parent=5 // pred_fallthru
        _
    $region6: #{tpu_custom_call.1} parent=1 // loop_footer
      %s22 = sadd.s32 1, %s18
    $region7: #{tpu_custom_call.1} parent=1 // loop_footer_branch
      %17 = sbr.rel target = $region3
    $region8: #{tpu_custom_call.1} parent=1 // loop_exit
      _
    %813 = vsyncpa [#allocation5], 1
    %s814 = scalar_lea.sflag [#allocation5], 1
    %815 = vsyncpa %s814, 1
    %816 = vsyncpa [#allocation6], 1
    %s817 = scalar_lea.sflag [#allocation6], 1
    %818 = vsyncpa %s817, 1

</llo_original>
